<compile_context>
chip_gen: v6e
topology: v6e:2x2x1
jax: 0.10.0
libtpu: 0.0.40
codegen_flags: <defaults>
</compile_context>

<pallas_src>
import functools

import jax
import jax.numpy as jnp
from jax.experimental import pallas as pl
from jax.experimental.pallas import tpu as pltpu

LN_EPS = 1e-5


def _cdiv(a, b):
    return (a + b - 1) // b


def _round_up(a, b):
    return _cdiv(a, b) * b


def _pdnorm_kernel(feat_ref, ctx_ref, vecs_ref, mats_ref, out_ref, *,
                   c, pack, mxu_bf16):
    pc = pack * c
    inv_c = 1.0 / c

    feat = feat_ref[...].astype(jnp.float32)            # (T, pc)  lane-dense
    vecs = vecs_ref[...]                                 # (8, pc)  f32 constants
    gamma, beta = vecs[0:1], vecs[1:2]
    b_shift, b_scale = vecs[2:3], vecs[3:4]

    if pack > 1:
        # --- LayerNorm statistics: ONE fused segmented reduction on the MXU.
        # concat([feat, feat^2]) (T, 2pc) x blockdiag(seg, seg) (2pc, 2pc);
        # sum / sum-of-squares are independent -> no serial mean->var chain.
        # Statistics path kept in f32 (single-pass var, per review guidance).
        seg2 = mats_ref[: 2 * pc, :]                      # (2pc, 2pc)
        y = jnp.concatenate([feat, feat * feat], axis=1)  # (T, 2pc)
        red = jnp.dot(y, seg2, preferred_element_type=jnp.float32)
        mean = red[:, :pc] * inv_c                        # free 128-lane slices
        ex2 = red[:, pc:] * inv_c
        var = jnp.maximum(ex2 - mean * mean, 0.0)
        w_mod = mats_ref[2 * pc:, :]                      # (pack*CTX, 2pc)
    else:
        # Fallback for C that does not divide 128: plain XLU reduction,
        # centered two-pass variance (matches the reference formula).
        mean = jnp.mean(feat, axis=-1, keepdims=True)
        xc = feat - mean
        var = jnp.mean(xc * xc, axis=-1, keepdims=True)
        w_mod = mats_ref[...]                             # (CTX, 2C)

    x = (feat - mean) * jax.lax.rsqrt(var + LN_EPS)
    x = x * gamma + beta                                  # affine, (1, pc) bcast

    # --- Adaptive modulation: ONE fused Linear(SiLU(context)) matmul.
    # Weights are pre-split + block-diagonal + concatenated host-side, so the
    # result is already in the packed layout; shift/scale are vreg-boundary
    # slices.  bf16 operands (MXU rate / half vreg footprint) when requested.
    ctx = ctx_ref[...].astype(jnp.float32)                # (T, pack*CTX)
    ctx = ctx * jax.nn.sigmoid(ctx)                       # SiLU (EUP)
    if mxu_bf16:
        mod = jnp.dot(ctx.astype(jnp.bfloat16), w_mod.astype(jnp.bfloat16),
                      preferred_element_type=jnp.float32)
    else:
        mod = jnp.dot(ctx, w_mod, preferred_element_type=jnp.float32)
    shift = mod[:, :pc] + b_shift
    scale = mod[:, pc:] + b_scale

    out_ref[...] = (x * (1.0 + scale) + shift).astype(out_ref.dtype)


def prepare_pdnorm_params(params, *, num_features, context_channels):
    """One-time host-side packing of PDNorm parameters.

    Hoists the weight transpose / split / block-diagonal layout / fusion out
    of the per-call path. Returns two constant slabs consumed by the kernel:
      vecs : (n_cond, 8, pack*C)   rows 0..3 = gamma, beta, b_shift, b_scale
      mats : concat([blockdiag(seg,seg), W_mod_fused], axis=0)   (pack>1)
             or W_mod_fused alone                                 (pack==1)
    """
    c = num_features
    ctx = context_channels
    pack = 128 // c if (c < 128 and 128 % c == 0) else 1
    pc = pack * c

    w = params["mod_weight"].astype(jnp.float32)          # (2C, CTX) nn.Linear
    b = params["mod_bias"].astype(jnp.float32)            # (2C,)
    w_shift_t = w[:c].T                                   # (CTX, C)
    w_scale_t = w[c:].T                                   # (CTX, C)

    if pack > 1:
        eye = jnp.eye(pack, dtype=jnp.float32)

        def block_diag(wt):  # (CTX, C) -> (pack*CTX, pack*C) block-diagonal
            return jnp.einsum("pq,kc->pkqc", eye, wt).reshape(pack * ctx, pc)

        # Fused modulation weight: columns [0:pc) -> shift, [pc:2pc) -> scale.
        w_fused = jnp.concatenate([block_diag(w_shift_t), block_diag(w_scale_t)],
                                  axis=1)                  # (pack*CTX, 2pc)
        # Fused segmented-reduction matrix: blockdiag(seg, seg) with
        # seg = kron(I_pack, ones(C,C)).
        seg2 = jnp.kron(jnp.eye(2 * pack, dtype=jnp.float32),
                        jnp.ones((c, c), jnp.float32))     # (2pc, 2pc)
        mats = jnp.concatenate([seg2, w_fused], axis=0)    # (2pc + pack*CTX, 2pc)
    else:
        mats = jnp.concatenate([w_shift_t, w_scale_t], axis=1)  # (CTX, 2C)

    gamma = jnp.tile(params["ln_gamma"].astype(jnp.float32), (1, pack))  # (n_cond, pc)
    beta = jnp.tile(params["ln_beta"].astype(jnp.float32), (1, pack))
    b_shift = jnp.tile(b[:c], pack)                        # (pc,)
    b_scale = jnp.tile(b[c:], pack)

    n_cond = gamma.shape[0]
    vecs = jnp.zeros((n_cond, 8, pc), jnp.float32)
    vecs = vecs.at[:, 0, :].set(gamma)
    vecs = vecs.at[:, 1, :].set(beta)
    vecs = vecs.at[:, 2, :].set(jnp.broadcast_to(b_shift, (n_cond, pc)))
    vecs = vecs.at[:, 3, :].set(jnp.broadcast_to(b_scale, (n_cond, pc)))

    return {
        "pack": pack,
        "num_features": c,
        "context_channels": ctx,
        "vecs": vecs,
        "mats": mats,
    }


def pdnorm_forward(point, prep, conditions, *, tile_rows=1024, mxu_bf16=None):
    """Functional equivalent of PDNorm.forward (decouple=True, adaptive=True).

    `tile_rows` is in packed rows (each packed row = `pack` points).
    `mxu_bf16` controls bf16 operands for the modulation matmul; defaults to
    True when feat is bf16 (production path), False for f32 inputs.
    """
    feat = point["feat"]            # (N, C)
    context = point["context"]      # (N, CTX)
    condition = point["condition"]
    if not isinstance(condition, str):
        condition = condition[0]
    assert condition in conditions
    idx = conditions.index(condition)

    n, c = feat.shape
    ctx_ch = context.shape[1]
    assert c == prep["num_features"] and ctx_ch == prep["context_channels"]
    pack = prep["pack"]
    pc = pack * c
    pctx = pack * ctx_ch
    if mxu_bf16 is None:
        mxu_bf16 = (feat.dtype == jnp.bfloat16)

    vecs = prep["vecs"][idx]        # (8, pc)  selected condition
    mats = prep["mats"]

    # Pad only to a multiple of `pack` (<= pack-1 points); the ragged last
    # grid tile is handled by the cdiv grid: OOB reads produce garbage only in
    # rows whose output writes are masked off (rows are fully independent —
    # all in-kernel matmuls are block-diagonal per point).
    rem = n % pack
    if rem:
        padn = pack - rem
        feat = jnp.pad(feat, ((0, padn), (0, 0)))
        context = jnp.pad(context, ((0, padn), (0, 0)))
    n_rows = _cdiv(n, pack)

    # Pure row-major reshapes (free): `pack` consecutive points per 128-lane row.
    feat_p = feat.reshape(n_rows, pc)
    ctx_p = context.reshape(n_rows, pctx)

    # Tile sizing: cap by rows present (sublane-aligned); big default tiles
    # amortize per-step overhead. VMEM limit derived from the actual buffers
    # and kept under the v7x 64 MiB physical VMEM (ample on v5e/v6e 128 MiB).
    tile_rows = max(8, min(tile_rows, _round_up(n_rows, 8)))
    grid_rows = _cdiv(n_rows, tile_rows)

    itemsize = jnp.dtype(feat.dtype).itemsize
    step_bytes = (
        tile_rows * (pc + pctx + pc) * itemsize * 2          # double-buffered I/O
        + tile_rows * 6 * max(pc, pctx) * 4                  # f32 intermediates
        + (mats.size + 8 * pc) * 4 * 2                       # constant slabs
    )
    vmem_limit = int(min(max(3 * step_bytes, 32 << 20), 48 << 20))

    out_p = pl.pallas_call(
        functools.partial(_pdnorm_kernel, c=c, pack=pack, mxu_bf16=mxu_bf16),
        out_shape=jax.ShapeDtypeStruct((n_rows, pc), feat.dtype),
        grid_spec=pltpu.PrefetchScalarGridSpec(
            num_scalar_prefetch=0,
            grid=(grid_rows,),
            in_specs=[
                pl.BlockSpec((tile_rows, pc), lambda i: (i, 0)),    # packed feat
                pl.BlockSpec((tile_rows, pctx), lambda i: (i, 0)),  # packed context
                pl.BlockSpec((8, pc), lambda i: (0, 0)),            # gamma/beta/biases
                pl.BlockSpec(mats.shape, lambda i: (0, 0)),         # seg2 + fused W
            ],
            out_specs=pl.BlockSpec((tile_rows, pc), lambda i: (i, 0)),
        ),
        compiler_params=pltpu.CompilerParams(
            dimension_semantics=("parallel",),
            vmem_limit_bytes=vmem_limit,
        ),
    )(feat_p, ctx_p, vecs, mats)

    out = out_p.reshape(n_rows * pack, c)[:n]
    new_point = dict(point)
    new_point["feat"] = out
    return new_point


def pdnorm_reference(point, params, conditions):
    """Pure-JAX reference (mirrors the PyTorch module) for correctness checking."""
    feat = point["feat"].astype(jnp.float32)
    context = point["context"].astype(jnp.float32)
    condition = point["condition"]
    if not isinstance(condition, str):
        condition = condition[0]
    idx = conditions.index(condition)
    mean = jnp.mean(feat, axis=-1, keepdims=True)
    var = jnp.mean((feat - mean) ** 2, axis=-1, keepdims=True)
    x = (feat - mean) / jnp.sqrt(var + LN_EPS)
    x = x * params["ln_gamma"][idx] + params["ln_beta"][idx]
    ctx = context * jax.nn.sigmoid(context)
    mod = ctx @ params["mod_weight"].T + params["mod_bias"]
    c = feat.shape[-1]
    shift, scale = mod[:, :c], mod[:, c:]
    return x * (1.0 + scale) + shift


if __name__ == "__main__":
    # Small, module-consistent shapes (context_channels default is 256, scaled
    # down).  N is deliberately NOT a multiple of pack or of the tile, so the
    # tiny pad-to-pack and the ragged cdiv-grid paths are both exercised.
    N = 203                 # number of points (ragged: 203 % 4 = 3)
    C = 32                  # num_features -> pack = 128 // 32 = 4 points/row
    CTX = 64                # context_channels (scaled down from 256)
    conditions = ("ScanNet", "S3DIS", "Structured3D")

    key = jax.random.PRNGKey(0)
    k_feat, k_ctx, k_w, k_bias = jax.random.split(key, 4)

    feat = jax.random.normal(k_feat, (N, C), dtype=jnp.float32)
    context = jax.random.normal(k_ctx, (N, CTX), dtype=jnp.float32)

    params = {
        "ln_gamma": jnp.stack(
            [jnp.ones((C,), jnp.float32) + 0.01 * i for i in range(len(conditions))]
        ),
        "ln_beta": jnp.stack(
            [jnp.zeros((C,), jnp.float32) + 0.02 * i for i in range(len(conditions))]
        ),
        # nn.Linear(CTX, 2*C): weight (2C, CTX), bias (2C,)
        "mod_weight": 0.05 * jax.random.normal(k_w, (2 * C, CTX), dtype=jnp.float32),
        "mod_bias": 0.05 * jax.random.normal(k_bias, (2 * C,), dtype=jnp.float32),
    }

    # One-time parameter packing (transpose / split / block-diag / fuse).
    prep = prepare_pdnorm_params(params, num_features=C, context_channels=CTX)

    point = {"feat": feat, "condition": "S3DIS", "context": context}
    ref = pdnorm_reference(point, params, conditions)

    # f32 path (tight tolerance vs the f32 reference).
    out_point = pdnorm_forward(point, prep, conditions)
    out = jax.block_until_ready(out_point["feat"])
    assert out.shape == (N, C) and out.dtype == feat.dtype
    assert jnp.allclose(out, ref, atol=2e-4, rtol=2e-4), "f32 mismatch vs reference"

    # bf16 production path (halved HBM traffic, bf16 modulation matmul).
    point_bf16 = {
        "feat": feat.astype(jnp.bfloat16),
        "condition": "S3DIS",
        "context": context.astype(jnp.bfloat16),
    }
    out_bf16 = jax.block_until_ready(
        pdnorm_forward(point_bf16, prep, conditions)["feat"]
    )
    assert out_bf16.shape == (N, C) and out_bf16.dtype == jnp.bfloat16
    assert jnp.allclose(out_bf16.astype(jnp.float32), ref, atol=5e-2, rtol=5e-2), \
        "bf16 mismatch vs reference"

    print("KERNEL_OK")
</pallas_src>

<mosaic_0001>
module attributes {stable_mosaic.version = 11 : i64} {
  func.func @_pdnorm_kernel(%arg0: i32, %arg1: memref<56x128xf32, #tpu.memory_space<vmem>>, %arg2: memref<56x256xf32, #tpu.memory_space<vmem>>, %arg3: memref<8x128xf32, #tpu.memory_space<vmem>>, %arg4: memref<512x256xf32, #tpu.memory_space<vmem>>, %arg5: memref<56x128xf32, #tpu.memory_space<vmem>>) attributes {dimension_semantics = [#tpu.dimension_semantics<parallel>], iteration_bounds = array<i64: 1>, scalar_prefetch = 0 : i64, scratch_operands = 0 : i64, tpu.core_type = #tpu.core_type<tc>, window_params = [{transform_indices = @transform_0, window_bounds = array<i64: 56, 128>}, {transform_indices = @transform_1, window_bounds = array<i64: 56, 256>}, {pipeline_mode = #tpu.pipeline_mode<synchronous>, transform_indices = @transform_2, window_bounds = array<i64: 8, 128>}, {pipeline_mode = #tpu.pipeline_mode<synchronous>, transform_indices = @transform_3, window_bounds = array<i64: 512, 256>}, {transform_indices = @transform_4, window_bounds = array<i64: 56, 128>}]} {
    %c0 = arith.constant 0 : index
    %c0_0 = arith.constant 0 : index
    %0 = vector.load %arg1[%c0, %c0_0] : memref<56x128xf32, #tpu.memory_space<vmem>>, vector<56x128xf32>
    %c0_1 = arith.constant 0 : index
    %c0_2 = arith.constant 0 : index
    %1 = vector.load %arg3[%c0_1, %c0_2] : memref<8x128xf32, #tpu.memory_space<vmem>>, vector<8x128xf32>
    %2 = vector.extract_strided_slice %1 {offsets = [0, 0], sizes = [1, 128], strides = [1, 1]} : vector<8x128xf32> to vector<1x128xf32>
    %3 = vector.extract_strided_slice %1 {offsets = [1, 0], sizes = [1, 128], strides = [1, 1]} : vector<8x128xf32> to vector<1x128xf32>
    %4 = vector.extract_strided_slice %1 {offsets = [2, 0], sizes = [1, 128], strides = [1, 1]} : vector<8x128xf32> to vector<1x128xf32>
    %5 = vector.extract_strided_slice %1 {offsets = [3, 0], sizes = [1, 128], strides = [1, 1]} : vector<8x128xf32> to vector<1x128xf32>
    %c0_3 = arith.constant 0 : index
    %c0_4 = arith.constant 0 : index
    %6 = vector.load %arg4[%c0_3, %c0_4] : memref<512x256xf32, #tpu.memory_space<vmem>>, vector<256x256xf32>
    %7 = arith.mulf %0, %0 : vector<56x128xf32>
    %8 = tpu.concatenate %0, %7 in 1 : vector<56x128xf32>, vector<56x128xf32> -> vector<56x256xf32>
    %cst = arith.constant dense<0.000000e+00> : vector<56x256xf32>
    %9 = tpu.matmul %8, %6, %cst {dimension_numbers = #tpu.dot_dimension_numbers<[1], [0], [0], [1], [0, 0, 1, 1], [], []>} : vector<56x256xf32>, vector<256x256xf32>, vector<56x256xf32> -> vector<56x256xf32>
    %10 = vector.extract_strided_slice %9 {offsets = [0, 0], sizes = [56, 128], strides = [1, 1]} : vector<56x256xf32> to vector<56x128xf32>
    %cst_5 = arith.constant 3.125000e-02 : f32
    %11 = vector.broadcast %cst_5 : f32 to vector<56x128xf32>
    %12 = arith.mulf %10, %11 : vector<56x128xf32>
    %13 = vector.extract_strided_slice %9 {offsets = [0, 128], sizes = [56, 128], strides = [1, 1]} : vector<56x256xf32> to vector<56x128xf32>
    %cst_6 = arith.constant 3.125000e-02 : f32
    %14 = vector.broadcast %cst_6 : f32 to vector<56x128xf32>
    %15 = arith.mulf %13, %14 : vector<56x128xf32>
    %16 = arith.mulf %12, %12 : vector<56x128xf32>
    %17 = arith.subf %15, %16 : vector<56x128xf32>
    %cst_7 = arith.constant 0.000000e+00 : f32
    %18 = vector.broadcast %cst_7 : f32 to vector<56x128xf32>
    %19 = arith.maximumf %17, %18 : vector<56x128xf32>
    %c256 = arith.constant 256 : index
    %c0_8 = arith.constant 0 : index
    %20 = vector.load %arg4[%c256, %c0_8] : memref<512x256xf32, #tpu.memory_space<vmem>>, vector<256x256xf32>
    %21 = arith.subf %0, %12 : vector<56x128xf32>
    %cst_9 = arith.constant 9.99999974E-6 : f32
    %22 = vector.broadcast %cst_9 : f32 to vector<56x128xf32>
    %23 = arith.addf %19, %22 : vector<56x128xf32>
    %24 = math.rsqrt %23 : vector<56x128xf32>
    %25 = arith.mulf %21, %24 : vector<56x128xf32>
    %26 = vector.broadcast %2 : vector<1x128xf32> to vector<56x128xf32>
    %27 = arith.mulf %25, %26 : vector<56x128xf32>
    %28 = vector.broadcast %3 : vector<1x128xf32> to vector<56x128xf32>
    %29 = arith.addf %27, %28 : vector<56x128xf32>
    %c0_10 = arith.constant 0 : index
    %c0_11 = arith.constant 0 : index
    %30 = vector.load %arg2[%c0_10, %c0_11] : memref<56x256xf32, #tpu.memory_space<vmem>>, vector<56x256xf32>
    %31 = arith.negf %30 : vector<56x256xf32>
    %32 = math.exp %31 : vector<56x256xf32>
    %cst_12 = arith.constant 1.000000e+00 : f32
    %33 = vector.broadcast %cst_12 : f32 to vector<56x256xf32>
    %34 = arith.addf %33, %32 : vector<56x256xf32>
    %35 = arith.divf %33, %34 : vector<56x256xf32>
    %36 = arith.mulf %30, %35 : vector<56x256xf32>
    %cst_13 = arith.constant dense<0.000000e+00> : vector<56x256xf32>
    %37 = tpu.matmul %36, %20, %cst_13 {dimension_numbers = #tpu.dot_dimension_numbers<[1], [0], [0], [1], [0, 0, 1, 1], [], []>} : vector<56x256xf32>, vector<256x256xf32>, vector<56x256xf32> -> vector<56x256xf32>
    %38 = vector.extract_strided_slice %37 {offsets = [0, 0], sizes = [56, 128], strides = [1, 1]} : vector<56x256xf32> to vector<56x128xf32>
    %39 = vector.broadcast %4 : vector<1x128xf32> to vector<56x128xf32>
    %40 = arith.addf %38, %39 : vector<56x128xf32>
    %41 = vector.extract_strided_slice %37 {offsets = [0, 128], sizes = [56, 128], strides = [1, 1]} : vector<56x256xf32> to vector<56x128xf32>
    %42 = vector.broadcast %5 : vector<1x128xf32> to vector<56x128xf32>
    %43 = arith.addf %41, %42 : vector<56x128xf32>
    %cst_14 = arith.constant 1.000000e+00 : f32
    %44 = vector.broadcast %cst_14 : f32 to vector<56x128xf32>
    %45 = arith.addf %44, %43 : vector<56x128xf32>
    %46 = arith.mulf %29, %45 : vector<56x128xf32>
    %47 = arith.addf %46, %40 : vector<56x128xf32>
    %c0_15 = arith.constant 0 : index
    %c0_16 = arith.constant 0 : index
    %48 = vector.load %arg5[%c0_15, %c0_16] : memref<56x128xf32, #tpu.memory_space<vmem>>, vector<56x128xf32>
    tpu.vector_store %arg5[%c0_15, %c0_16], %47 {strides = array<i32>} : memref<56x128xf32, #tpu.memory_space<vmem>>, vector<56x128xf32>,
    return
  }
  func.func @transform_0(%arg0: i32) -> (i32, i32) {
    %c0_i32 = arith.constant 0 : i32
    %c0_i32_0 = arith.constant 0 : i32
    return %arg0, %c0_i32 : i32, i32
  }
  func.func @transform_1(%arg0: i32) -> (i32, i32) {
    %c0_i32 = arith.constant 0 : i32
    %c0_i32_0 = arith.constant 0 : i32
    return %arg0, %c0_i32 : i32, i32
  }
  func.func @transform_2(%arg0: i32) -> (i32, i32) {
    %c0_i32 = arith.constant 0 : i32
    %c0_i32_0 = arith.constant 0 : i32
    %c0_i32_1 = arith.constant 0 : i32
    return %c0_i32, %c0_i32_0 : i32, i32
  }
  func.func @transform_3(%arg0: i32) -> (i32, i32) {
    %c0_i32 = arith.constant 0 : i32
    %c0_i32_0 = arith.constant 0 : i32
    %c0_i32_1 = arith.constant 0 : i32
    return %c0_i32, %c0_i32_0 : i32, i32
  }
  func.func @transform_4(%arg0: i32) -> (i32, i32) {
    %c0_i32 = arith.constant 0 : i32
    %c0_i32_0 = arith.constant 0 : i32
    return %arg0, %c0_i32 : i32, i32
  }
}

</mosaic_0001>

<llo_original>
// kernel: tpu_custom_call.1
$region0: #{tpu_custom_call.1}
  #allocation0 [shape = 'u32[]', space=smem, size = 0x4, offset = 0x4, fixed_abs, tag = 'smem constant byte address 0x4 - core index']
  #allocation1 [shape = 'u32[144,128]{1,0:T(1,128)}', space=vmem, size = 0x12000, scoped, tag = 'internal scratch']
  %s0 = inlined_call_operand.hbm [shape: f32[51,128], index: 0, kind: input, shape index: {}]
  %s1 = inlined_call_operand.hbm [shape: f32[51,256], index: 1, kind: input, shape index: {}]
  %s2 = inlined_call_operand.hbm [shape: f32[8,128], index: 2, kind: input, shape index: {}]
  %s3 = inlined_call_operand.hbm [shape: f32[512,256], index: 3, kind: input, shape index: {}]
  %s4 = inlined_call_operand.hbm [shape: f32[51,128], index: 4, kind: output, shape index: {}]
  %s5 = sld [smem:[#allocation0]]
  $region42: #{tpu_custom_call.1} parent=0
    _
  %s7 = ssub.s32 1, %s5
  %s8 = scalar_select 0, %s7, %s5
  $region1: #{tpu_custom_call.1} parent=0
    #allocation2 [shape = 'u8[28672]{0}', space=vmem, size = 0x7000, scoped, tag = 'input window, operand 0, single buffered']
    #allocation3 [shape = 's32[1]{0}', space=sflag, size = 0x4, scoped, tag = 'scoped memory for tpu_custom_call.1']
    #allocation4 [shape = 's32[1]{0}', space=sflag, size = 0x4, scoped, tag = 'scoped memory for tpu_custom_call.1']
    #allocation5 [shape = 'u8[57344]{0}', space=vmem, size = 0xe000, scoped, tag = 'input window, operand 1, single buffered']
    #allocation6 [shape = 's32[1]{0}', space=sflag, size = 0x4, scoped, tag = 'scoped memory for tpu_custom_call.1']
    #allocation7 [shape = 'u8[4096]{0}', space=vmem, size = 0x1000, scoped, tag = 'input window, operand 2, single buffered']
    #allocation8 [shape = 'u8[524288]{0}', space=vmem, size = 0x80000, scoped, tag = 'input window, operand 3, single buffered']
    #allocation9 [shape = 's32[1]{0}', space=sflag, size = 0x4, scoped, tag = 'scoped memory for tpu_custom_call.1']
    #allocation10 [shape = 'u8[28672]{0}', space=vmem, size = 0x7000, scoped, tag = 'output window, operand 0, single buffered']
    %9 = vsyncpa [#allocation3], 0
    %10 = vsyncpa [#allocation6], 0
    %11 = vsyncpa [#allocation9], 0
    %12 = vsyncpa [#allocation4], 0
    // Predicated region
    $region2: #{tpu_custom_call.1} parent=1 // pred_check
      _
    $region3: #{tpu_custom_call.1} parent=1 // pred_check_branch
      %14 = sbr.rel (0) target = $region5
    $region4: #{tpu_custom_call.1} parent=1 // pred_region
      %s16 = ssub.s32 896, 896
      %17 = vsyncadd [#allocation3], %s16
      %s18 = sshll.u32 [#allocation2], 4
      %s19 = int_to_ptr.vmem [resolvable:$true] %s18
      %24 = dma.hbm_to_vmem [thread:$0]  %s0, 896, %s19, [#allocation3], 128, 128, 8
    $region5: #{tpu_custom_call.1} parent=1 // pred_fallthru
      _
    // Predicated region
    $region6: #{tpu_custom_call.1} parent=1 // pred_check
      _
    $region7: #{tpu_custom_call.1} parent=1 // pred_check_branch
      %26 = sbr.rel (0) target = $region9
    $region8: #{tpu_custom_call.1} parent=1 // pred_region
      %s28 = ssub.s32 1792, 1792
      %29 = vsyncadd [#allocation6], %s28
      %s30 = sshll.u32 [#allocation5], 4
      %s31 = int_to_ptr.vmem [resolvable:$true] %s30
      %36 = dma.hbm_to_vmem [thread:$0]  %s1, 1792, %s31, [#allocation6], 256, 256, 16
    $region9: #{tpu_custom_call.1} parent=1 // pred_fallthru
      _
    // Predicated region
    $region10: #{tpu_custom_call.1} parent=1 // pred_check
      _
    $region11: #{tpu_custom_call.1} parent=1 // pred_check_branch
      %38 = sbr.rel (0) target = $region13
    $region12: #{tpu_custom_call.1} parent=1 // pred_region
      %s40 = ssub.s32 128, 128
      %41 = vsyncadd [#allocation6], %s40
      %s43 = sshll.u32 [#allocation7], 4
      %s44 = int_to_ptr.vmem [resolvable:$true] %s43
      %46 = dma.hbm_to_vmem [thread:$0]  %s2, 128, %s44, [#allocation6]
    $region13: #{tpu_custom_call.1} parent=1 // pred_fallthru
      _
    // Predicated region
    $region14: #{tpu_custom_call.1} parent=1 // pred_check
      _
    $region15: #{tpu_custom_call.1} parent=1 // pred_check_branch
      %48 = sbr.rel (0) target = $region17
    $region16: #{tpu_custom_call.1} parent=1 // pred_region
      %s50 = ssub.s32 16384, 16384
      %51 = vsyncadd [#allocation9], %s50
      %s52 = sshll.u32 [#allocation8], 4
      %s53 = int_to_ptr.vmem [resolvable:$true] %s52
      %58 = dma.hbm_to_vmem [thread:$0]  %s3, 16384, %s53, [#allocation9], 256, 256, 16
    $region17: #{tpu_custom_call.1} parent=1 // pred_fallthru
      _
    // Predicated region
    $region18: #{tpu_custom_call.1} parent=1 // pred_check
      _
    $region19: #{tpu_custom_call.1} parent=1 // pred_check_branch
      %60 = sbr.rel (0) target = $region21
    $region20: #{tpu_custom_call.1} parent=1 // pred_region
      %61 = dma.done [#allocation3], 896
    $region21: #{tpu_custom_call.1} parent=1 // pred_fallthru
      _
    // Predicated region
    $region22: #{tpu_custom_call.1} parent=1 // pred_check
      _
    $region23: #{tpu_custom_call.1} parent=1 // pred_check_branch
      %63 = sbr.rel (0) target = $region25
    $region24: #{tpu_custom_call.1} parent=1 // pred_region
      %64 = dma.done [#allocation6], 1792
    $region25: #{tpu_custom_call.1} parent=1 // pred_fallthru
      _
    // Predicated region
    $region26: #{tpu_custom_call.1} parent=1 // pred_check
      _
    $region27: #{tpu_custom_call.1} parent=1 // pred_check_branch
      %66 = sbr.rel (0) target = $region29
    $region28: #{tpu_custom_call.1} parent=1 // pred_region
      %67 = dma.done [#allocation6], 128
    $region29: #{tpu_custom_call.1} parent=1 // pred_fallthru
      _
    // Predicated region
    $region30: #{tpu_custom_call.1} parent=1 // pred_check
      _
    $region31: #{tpu_custom_call.1} parent=1 // pred_check_branch
      %69 = sbr.rel (0) target = $region33
    $region32: #{tpu_custom_call.1} parent=1 // pred_region
      %70 = dma.done [#allocation9], 16384
    $region33: #{tpu_custom_call.1} parent=1 // pred_fallthru
      _
    %v71 = vld [vmem:[#allocation2] sm:$0xff]
    %v72 = vld [vmem:[#allocation2 + $0x8] sm:$0xff]
    %v73 = vld [vmem:[#allocation2 + $0x10] sm:$0xff]
    %v74 = vld [vmem:[#allocation2 + $0x18] sm:$0xff]
    %v75 = vld [vmem:[#allocation2 + $0x20] sm:$0xff]
    %v76 = vld [vmem:[#allocation2 + $0x28] sm:$0xff]
    %v77 = vld [vmem:[#allocation2 + $0x30] sm:$0xff]
    %v78 = vld [vmem:[#allocation7] sm:$0xff]
    %v79 = vld [vmem:[#allocation8] sm:$0xff]
    %v80 = vld [vmem:[#allocation8 + $0x8] sm:$0xff]
    %v81 = vld [vmem:[#allocation8 + $0x10] sm:$0xff]
    %v82 = vld [vmem:[#allocation8 + $0x18] sm:$0xff]
    %v83 = vld [vmem:[#allocation8 + $0x20] sm:$0xff]
    %v84 = vld [vmem:[#allocation8 + $0x28] sm:$0xff]
    %v85 = vld [vmem:[#allocation8 + $0x30] sm:$0xff]
    %v86 = vld [vmem:[#allocation8 + $0x38] sm:$0xff]
    %v87 = vld [vmem:[#allocation8 + $0x40] sm:$0xff]
    %v88 = vld [vmem:[#allocation8 + $0x48] sm:$0xff]
    %v89 = vld [vmem:[#allocation8 + $0x50] sm:$0xff]
    %v90 = vld [vmem:[#allocation8 + $0x58] sm:$0xff]
    %v91 = vld [vmem:[#allocation8 + $0x60] sm:$0xff]
    %v92 = vld [vmem:[#allocation8 + $0x68] sm:$0xff]
    %v93 = vld [vmem:[#allocation8 + $0x70] sm:$0xff]
    %v94 = vld [vmem:[#allocation8 + $0x78] sm:$0xff]
    %v95 = vld [vmem:[#allocation8 + $0x80] sm:$0xff]
    %v96 = vld [vmem:[#allocation8 + $0x88] sm:$0xff]
    %v97 = vld [vmem:[#allocation8 + $0x90] sm:$0xff]
    %v98 = vld [vmem:[#allocation8 + $0x98] sm:$0xff]
    %v99 = vld [vmem:[#allocation8 + $0xa0] sm:$0xff]
    %v100 = vld [vmem:[#allocation8 + $0xa8] sm:$0xff]
    %v101 = vld [vmem:[#allocation8 + $0xb0] sm:$0xff]
    %v102 = vld [vmem:[#allocation8 + $0xb8] sm:$0xff]
    %v103 = vld [vmem:[#allocation8 + $0xc0] sm:$0xff]
    %v104 = vld [vmem:[#allocation8 + $0xc8] sm:$0xff]
    %v105 = vld [vmem:[#allocation8 + $0xd0] sm:$0xff]
    %v106 = vld [vmem:[#allocation8 + $0xd8] sm:$0xff]
    %v107 = vld [vmem:[#allocation8 + $0xe0] sm:$0xff]
    %v108 = vld [vmem:[#allocation8 + $0xe8] sm:$0xff]
    %v109 = vld [vmem:[#allocation8 + $0xf0] sm:$0xff]
    %v110 = vld [vmem:[#allocation8 + $0xf8] sm:$0xff]
    %v111 = vld [vmem:[#allocation8 + $0x100] sm:$0xff]
    %v112 = vld [vmem:[#allocation8 + $0x108] sm:$0xff]
    %v113 = vld [vmem:[#allocation8 + $0x110] sm:$0xff]
    %v114 = vld [vmem:[#allocation8 + $0x118] sm:$0xff]
    %v115 = vld [vmem:[#allocation8 + $0x120] sm:$0xff]
    %v116 = vld [vmem:[#allocation8 + $0x128] sm:$0xff]
    %v117 = vld [vmem:[#allocation8 + $0x130] sm:$0xff]
    %v118 = vld [vmem:[#allocation8 + $0x138] sm:$0xff]
    %v119 = vld [vmem:[#allocation8 + $0x140] sm:$0xff]
    %v120 = vld [vmem:[#allocation8 + $0x148] sm:$0xff]
    %v121 = vld [vmem:[#allocation8 + $0x150] sm:$0xff]
    %v122 = vld [vmem:[#allocation8 + $0x158] sm:$0xff]
    %v123 = vld [vmem:[#allocation8 + $0x160] sm:$0xff]
    %v124 = vld [vmem:[#allocation8 + $0x168] sm:$0xff]
    %v125 = vld [vmem:[#allocation8 + $0x170] sm:$0xff]
    %v126 = vld [vmem:[#allocation8 + $0x178] sm:$0xff]
    %v127 = vld [vmem:[#allocation8 + $0x180] sm:$0xff]
    %v128 = vld [vmem:[#allocation8 + $0x188] sm:$0xff]
    %v129 = vld [vmem:[#allocation8 + $0x190] sm:$0xff]
    %v130 = vld [vmem:[#allocation8 + $0x198] sm:$0xff]
    %v131 = vld [vmem:[#allocation8 + $0x1a0] sm:$0xff]
    %v132 = vld [vmem:[#allocation8 + $0x1a8] sm:$0xff]
    %v133 = vld [vmem:[#allocation8 + $0x1b0] sm:$0xff]
    %v134 = vld [vmem:[#allocation8 + $0x1b8] sm:$0xff]
    %v135 = vld [vmem:[#allocation8 + $0x1c0] sm:$0xff]
    %v136 = vld [vmem:[#allocation8 + $0x1c8] sm:$0xff]
    %v137 = vld [vmem:[#allocation8 + $0x1d0] sm:$0xff]
    %v138 = vld [vmem:[#allocation8 + $0x1d8] sm:$0xff]
    %v139 = vld [vmem:[#allocation8 + $0x1e0] sm:$0xff]
    %v140 = vld [vmem:[#allocation8 + $0x1e8] sm:$0xff]
    %v141 = vld [vmem:[#allocation8 + $0x1f0] sm:$0xff]
    %v142 = vld [vmem:[#allocation8 + $0x1f8] sm:$0xff]
    %v143 = vmul.f32 %v71, %v71
    %v144 = vmul.f32 %v72, %v72
    %v145 = vmul.f32 %v73, %v73
    %v146 = vmul.f32 %v74, %v74
    %v147 = vmul.f32 %v75, %v75
    %v148 = vmul.f32 %v76, %v76
    %v149 = vmul.f32 %v77, %v77
    %150 = vmatprep.subr.mxu0 %v110
    %151 = vmatpush1.msra.mxu0 %v109
    %152 = vmatprep.subr.mxu0 %v108
    %153 = vmatpush1.msra.mxu0 %v107
    %154 = vmatprep.subr.mxu0 %v106
    %155 = vmatpush1.msra.mxu0 %v105
    %156 = vmatprep.subr.mxu0 %v104
    %157 = vmatpush1.msra.mxu0 %v103
    %158 = vmatprep.subr.mxu0 %v102
    %159 = vmatpush1.msra.mxu0 %v101
    %160 = vmatprep.subr.mxu0 %v100
    %161 = vmatpush1.msra.mxu0 %v99
    %162 = vmatprep.subr.mxu0 %v98
    %163 = vmatpush1.msra.mxu0 %v97
    %164 = vmatprep.subr.mxu0 %v96
    %165 = vmatpush1.msra.mxu0 %v95
    %166 = vmatprep.subr.mxu0 %v94
    %167 = vmatpush1.msra.mxu0 %v93
    %168 = vmatprep.subr.mxu0 %v92
    %169 = vmatpush1.msra.mxu0 %v91
    %170 = vmatprep.subr.mxu0 %v90
    %171 = vmatpush1.msra.mxu0 %v89
    %172 = vmatprep.subr.mxu0 %v88
    %173 = vmatpush1.msra.mxu0 %v87
    %174 = vmatprep.subr.mxu0 %v86
    %175 = vmatpush1.msra.mxu0 %v85
    %176 = vmatprep.subr.mxu0 %v84
    %177 = vmatpush1.msra.mxu0 %v83
    %178 = vmatprep.subr.mxu0 %v82
    %179 = vmatpush1.msra.mxu0 %v81
    %180 = vmatprep.subr.mxu0 %v80
    %181 = vmatpush1.msra.mxu0 %v79
    %182 = vmatprep.subr.mxu0 %v142
    %183 = vmatpush2.msra.mxu0 %v141
    %184 = vmatprep.subr.mxu0 %v140
    %185 = vmatpush2.msra.mxu0 %v139
    %186 = vmatprep.subr.mxu0 %v138
    %187 = vmatpush2.msra.mxu0 %v137
    %188 = vmatprep.subr.mxu0 %v136
    %189 = vmatpush2.msra.mxu0 %v135
    %190 = vmatprep.subr.mxu0 %v134
    %191 = vmatpush2.msra.mxu0 %v133
    %192 = vmatprep.subr.mxu0 %v132
    %193 = vmatpush2.msra.mxu0 %v131
    %194 = vmatprep.subr.mxu0 %v130
    %195 = vmatpush2.msra.mxu0 %v129
    %196 = vmatprep.subr.mxu0 %v128
    %197 = vmatpush2.msra.mxu0 %v127
    %198 = vmatprep.subr.mxu0 %v126
    %199 = vmatpush2.msra.mxu0 %v125
    %200 = vmatprep.subr.mxu0 %v124
    %201 = vmatpush2.msra.mxu0 %v123
    %202 = vmatprep.subr.mxu0 %v122
    %203 = vmatpush2.msra.mxu0 %v121
    %204 = vmatprep.subr.mxu0 %v120
    %205 = vmatpush2.msra.mxu0 %v119
    %206 = vmatprep.subr.mxu0 %v118
    %207 = vmatpush2.msra.mxu0 %v117
    %208 = vmatprep.subr.mxu0 %v116
    %209 = vmatpush2.msra.mxu0 %v115
    %210 = vmatprep.subr.mxu0 %v114
    %211 = vmatpush2.msra.mxu0 %v113
    %212 = vmatprep.subr.mxu0 %v112
    %213 = vmatpush2.msra.mxu0 %v111
    %214 = vmatprep.mubr.f32.mxu0 %v143
    %215 = vmatmul.mubr.f32.gmra.mxu0 %v71
    %v216 = vpop.f32.mrf.mxu0
    %v217 = vadd.f32 0.0, %v216
    %v218 = vpop.f32.mrf.mxu0
    %v219 = vadd.f32 0.0, %v218
    %220 = vmatprep.mubr.f32.mxu0 %v144
    %221 = vmatmul.mubr.f32.gmra.mxu0 %v72
    %v222 = vpop.f32.mrf.mxu0
    %v223 = vadd.f32 0.0, %v222
    %v224 = vpop.f32.mrf.mxu0
    %v225 = vadd.f32 0.0, %v224
    %226 = vmatprep.mubr.f32.mxu0 %v145
    %227 = vmatmul.mubr.f32.gmra.mxu0 %v73
    %v228 = vpop.f32.mrf.mxu0
    %v229 = vadd.f32 0.0, %v228
    %v230 = vpop.f32.mrf.mxu0
    %v231 = vadd.f32 0.0, %v230
    %232 = vmatprep.mubr.f32.mxu0 %v146
    %233 = vmatmul.mubr.f32.gmra.mxu0 %v74
    %v234 = vpop.f32.mrf.mxu0
    %v235 = vadd.f32 0.0, %v234
    %v236 = vpop.f32.mrf.mxu0
    %v237 = vadd.f32 0.0, %v236
    %238 = vmatprep.mubr.f32.mxu0 %v147
    %239 = vmatmul.mubr.f32.gmra.mxu0 %v75
    %v240 = vpop.f32.mrf.mxu0
    %v241 = vadd.f32 0.0, %v240
    %v242 = vpop.f32.mrf.mxu0
    %v243 = vadd.f32 0.0, %v242
    %244 = vmatprep.mubr.f32.mxu0 %v148
    %245 = vmatmul.mubr.f32.gmra.mxu0 %v76
    %v246 = vpop.f32.mrf.mxu0
    %v247 = vadd.f32 0.0, %v246
    %v248 = vpop.f32.mrf.mxu0
    %v249 = vadd.f32 0.0, %v248
    %250 = vmatprep.mubr.f32.mxu0 %v149
    %251 = vmatmul.mubr.f32.gmra.mxu0 %v77
    %v252 = vpop.f32.mrf.mxu0
    %v253 = vadd.f32 0.0, %v252
    %v254 = vpop.f32.mrf.mxu0
    %v255 = vadd.f32 0.0, %v254
    %256 = vdwg.mxu0
    %v257 = vmul.f32 %v217, 0.03125
    %v258 = vmul.f32 %v223, 0.03125
    %v259 = vmul.f32 %v229, 0.03125
    %v260 = vmul.f32 %v235, 0.03125
    %v261 = vmul.f32 %v241, 0.03125
    %v262 = vmul.f32 %v247, 0.03125
    %v263 = vmul.f32 %v253, 0.03125
    %v264 = vmul.f32 %v219, 0.03125
    %v265 = vmul.f32 %v225, 0.03125
    %v266 = vmul.f32 %v231, 0.03125
    %v267 = vmul.f32 %v237, 0.03125
    %v268 = vmul.f32 %v243, 0.03125
    %v269 = vmul.f32 %v249, 0.03125
    %v270 = vmul.f32 %v255, 0.03125
    %v271 = vmul.f32 %v257, %v257
    %v272 = vmul.f32 %v258, %v258
    %v273 = vmul.f32 %v259, %v259
    %v274 = vmul.f32 %v260, %v260
    %v275 = vmul.f32 %v261, %v261
    %v276 = vmul.f32 %v262, %v262
    %v277 = vmul.f32 %v263, %v263
    %v278 = vsub.f32 %v264, %v271
    %v279 = vsub.f32 %v265, %v272
    %v280 = vsub.f32 %v266, %v273
    %v281 = vsub.f32 %v267, %v274
    %v282 = vsub.f32 %v268, %v275
    %v283 = vsub.f32 %v269, %v276
    %v284 = vsub.f32 %v270, %v277
    %v285 = vmax.f32 %v278, 0.0
    %v286 = vmax.f32 %v279, 0.0
    %v287 = vmax.f32 %v280, 0.0
    %v288 = vmax.f32 %v281, 0.0
    %v289 = vmax.f32 %v282, 0.0
    %v290 = vmax.f32 %v283, 0.0
    %v291 = vmax.f32 %v284, 0.0
    %v292 = vld [vmem:[#allocation8 + $0x200] sm:$0xff]
    %v293 = vld [vmem:[#allocation8 + $0x208] sm:$0xff]
    %v294 = vld [vmem:[#allocation8 + $0x210] sm:$0xff]
    %v295 = vld [vmem:[#allocation8 + $0x218] sm:$0xff]
    %v296 = vld [vmem:[#allocation8 + $0x220] sm:$0xff]
    %v297 = vld [vmem:[#allocation8 + $0x228] sm:$0xff]
    %v298 = vld [vmem:[#allocation8 + $0x230] sm:$0xff]
    %v299 = vld [vmem:[#allocation8 + $0x238] sm:$0xff]
    %v300 = vld [vmem:[#allocation8 + $0x240] sm:$0xff]
    %v301 = vld [vmem:[#allocation8 + $0x248] sm:$0xff]
    %v302 = vld [vmem:[#allocation8 + $0x250] sm:$0xff]
    %v303 = vld [vmem:[#allocation8 + $0x258] sm:$0xff]
    %v304 = vld [vmem:[#allocation8 + $0x260] sm:$0xff]
    %v305 = vld [vmem:[#allocation8 + $0x268] sm:$0xff]
    %v306 = vld [vmem:[#allocation8 + $0x270] sm:$0xff]
    %v307 = vld [vmem:[#allocation8 + $0x278] sm:$0xff]
    %v308 = vld [vmem:[#allocation8 + $0x280] sm:$0xff]
    %v309 = vld [vmem:[#allocation8 + $0x288] sm:$0xff]
    %v310 = vld [vmem:[#allocation8 + $0x290] sm:$0xff]
    %v311 = vld [vmem:[#allocation8 + $0x298] sm:$0xff]
    %v312 = vld [vmem:[#allocation8 + $0x2a0] sm:$0xff]
    %v313 = vld [vmem:[#allocation8 + $0x2a8] sm:$0xff]
    %v314 = vld [vmem:[#allocation8 + $0x2b0] sm:$0xff]
    %v315 = vld [vmem:[#allocation8 + $0x2b8] sm:$0xff]
    %v316 = vld [vmem:[#allocation8 + $0x2c0] sm:$0xff]
    %v317 = vld [vmem:[#allocation8 + $0x2c8] sm:$0xff]
    %v318 = vld [vmem:[#allocation8 + $0x2d0] sm:$0xff]
    %v319 = vld [vmem:[#allocation8 + $0x2d8] sm:$0xff]
    %v320 = vld [vmem:[#allocation8 + $0x2e0] sm:$0xff]
    %v321 = vld [vmem:[#allocation8 + $0x2e8] sm:$0xff]
    %v322 = vld [vmem:[#allocation8 + $0x2f0] sm:$0xff]
    %v323 = vld [vmem:[#allocation8 + $0x2f8] sm:$0xff]
    %v324 = vld [vmem:[#allocation8 + $0x300] sm:$0xff]
    %v325 = vld [vmem:[#allocation8 + $0x308] sm:$0xff]
    %v326 = vld [vmem:[#allocation8 + $0x310] sm:$0xff]
    %v327 = vld [vmem:[#allocation8 + $0x318] sm:$0xff]
    %v328 = vld [vmem:[#allocation8 + $0x320] sm:$0xff]
    %v329 = vld [vmem:[#allocation8 + $0x328] sm:$0xff]
    %v330 = vld [vmem:[#allocation8 + $0x330] sm:$0xff]
    %v331 = vld [vmem:[#allocation8 + $0x338] sm:$0xff]
    %v332 = vld [vmem:[#allocation8 + $0x340] sm:$0xff]
    %v333 = vld [vmem:[#allocation8 + $0x348] sm:$0xff]
    %v334 = vld [vmem:[#allocation8 + $0x350] sm:$0xff]
    %v335 = vld [vmem:[#allocation8 + $0x358] sm:$0xff]
    %v336 = vld [vmem:[#allocation8 + $0x360] sm:$0xff]
    %v337 = vld [vmem:[#allocation8 + $0x368] sm:$0xff]
    %v338 = vld [vmem:[#allocation8 + $0x370] sm:$0xff]
    %v339 = vld [vmem:[#allocation8 + $0x378] sm:$0xff]
    %v340 = vld [vmem:[#allocation8 + $0x380] sm:$0xff]
    %v341 = vld [vmem:[#allocation8 + $0x388] sm:$0xff]
    %v342 = vld [vmem:[#allocation8 + $0x390] sm:$0xff]
    %v343 = vld [vmem:[#allocation8 + $0x398] sm:$0xff]
    %v344 = vld [vmem:[#allocation8 + $0x3a0] sm:$0xff]
    %v345 = vld [vmem:[#allocation8 + $0x3a8] sm:$0xff]
    %v346 = vld [vmem:[#allocation8 + $0x3b0] sm:$0xff]
    %v347 = vld [vmem:[#allocation8 + $0x3b8] sm:$0xff]
    %v348 = vld [vmem:[#allocation8 + $0x3c0] sm:$0xff]
    %v349 = vld [vmem:[#allocation8 + $0x3c8] sm:$0xff]
    %v350 = vld [vmem:[#allocation8 + $0x3d0] sm:$0xff]
    %v351 = vld [vmem:[#allocation8 + $0x3d8] sm:$0xff]
    %v352 = vld [vmem:[#allocation8 + $0x3e0] sm:$0xff]
    %v353 = vld [vmem:[#allocation8 + $0x3e8] sm:$0xff]
    %v354 = vld [vmem:[#allocation8 + $0x3f0] sm:$0xff]
    %v355 = vld [vmem:[#allocation8 + $0x3f8] sm:$0xff]
    %v356 = vsub.f32 %v71, %v257
    %v357 = vsub.f32 %v72, %v258
    %v358 = vsub.f32 %v73, %v259
    %v359 = vsub.f32 %v74, %v260
    %v360 = vsub.f32 %v75, %v261
    %v361 = vsub.f32 %v76, %v262
    %v362 = vsub.f32 %v77, %v263
    %v363 = vadd.f32 %v285, 1e-05
    %v364 = vadd.f32 %v286, 1e-05
    %v365 = vadd.f32 %v287, 1e-05
    %v366 = vadd.f32 %v288, 1e-05
    %v367 = vadd.f32 %v289, 1e-05
    %v368 = vadd.f32 %v290, 1e-05
    %v369 = vadd.f32 %v291, 1e-05
    %v370 = vrsqrt.pop %v363
    %v371 = vrsqrt.pop %v364
    %v372 = vrsqrt.pop %v365
    %v373 = vrsqrt.pop %v366
    %v374 = vrsqrt.pop %v367
    %v375 = vrsqrt.pop %v368
    %v376 = vrsqrt.pop %v369
    %v377 = vmul.f32 %v356, %v370
    %v378 = vmul.f32 %v357, %v371
    %v379 = vmul.f32 %v358, %v372
    %v380 = vmul.f32 %v359, %v373
    %v381 = vmul.f32 %v360, %v374
    %v382 = vmul.f32 %v361, %v375
    %v383 = vmul.f32 %v362, %v376
    %v384 = vlaneseq
    %v385 = vshrl.u32 %v384, 7
    %v386 = vsub.s32 0, %v385
    %v387 = vrot.slane %v78, %v386
    %v388 = vmul.f32 %v377, %v387
    %v389 = vmul.f32 %v378, %v387
    %v390 = vmul.f32 %v379, %v387
    %v391 = vmul.f32 %v380, %v387
    %v392 = vmul.f32 %v381, %v387
    %v393 = vmul.f32 %v382, %v387
    %v394 = vmul.f32 %v383, %v387
    %v395 = vlaneseq
    %v396 = vshrl.u32 %v395, 7
    %v397 = vsub.s32 1, %v396
    %v398 = vrot.slane %v78, %v397
    %v399 = vadd.f32 %v388, %v398
    %v400 = vadd.f32 %v389, %v398
    %v401 = vadd.f32 %v390, %v398
    %v402 = vadd.f32 %v391, %v398
    %v403 = vadd.f32 %v392, %v398
    %v404 = vadd.f32 %v393, %v398
    %v405 = vadd.f32 %v394, %v398
    %v406 = vld [vmem:[#allocation5] sm:$0xff]
    %v407 = vld [vmem:[#allocation5 + $0x8] sm:$0xff]
    %v408 = vld [vmem:[#allocation5 + $0x10] sm:$0xff]
    %v409 = vld [vmem:[#allocation5 + $0x18] sm:$0xff]
    %v410 = vld [vmem:[#allocation5 + $0x20] sm:$0xff]
    %v411 = vld [vmem:[#allocation5 + $0x28] sm:$0xff]
    %v412 = vld [vmem:[#allocation5 + $0x30] sm:$0xff]
    %v413 = vld [vmem:[#allocation5 + $0x38] sm:$0xff]
    %v414 = vld [vmem:[#allocation5 + $0x40] sm:$0xff]
    %v415 = vld [vmem:[#allocation5 + $0x48] sm:$0xff]
    %v416 = vld [vmem:[#allocation5 + $0x50] sm:$0xff]
    %v417 = vld [vmem:[#allocation5 + $0x58] sm:$0xff]
    %v418 = vld [vmem:[#allocation5 + $0x60] sm:$0xff]
    %v419 = vld [vmem:[#allocation5 + $0x68] sm:$0xff]
    %v420 = vxor.u32 %v406, 2147483648
    %v421 = vxor.u32 %v407, 2147483648
    %v422 = vxor.u32 %v408, 2147483648
    %v423 = vxor.u32 %v409, 2147483648
    %v424 = vxor.u32 %v410, 2147483648
    %v425 = vxor.u32 %v411, 2147483648
    %v426 = vxor.u32 %v412, 2147483648
    %v427 = vxor.u32 %v413, 2147483648
    %v428 = vxor.u32 %v414, 2147483648
    %v429 = vxor.u32 %v415, 2147483648
    %v430 = vxor.u32 %v416, 2147483648
    %v431 = vxor.u32 %v417, 2147483648
    %v432 = vxor.u32 %v418, 2147483648
    %v433 = vxor.u32 %v419, 2147483648
    %v434 = vmul.f32 %v420, 1.442695
    %v435 = vpow.pop %v434
    %v436 = vmul.f32 %v421, 1.442695
    %v437 = vpow.pop %v436
    %v438 = vmul.f32 %v422, 1.442695
    %v439 = vpow.pop %v438
    %v440 = vmul.f32 %v423, 1.442695
    %v441 = vpow.pop %v440
    %v442 = vmul.f32 %v424, 1.442695
    %v443 = vpow.pop %v442
    %v444 = vmul.f32 %v425, 1.442695
    %v445 = vpow.pop %v444
    %v446 = vmul.f32 %v426, 1.442695
    %v447 = vpow.pop %v446
    %v448 = vmul.f32 %v427, 1.442695
    %v449 = vpow.pop %v448
    %v450 = vmul.f32 %v428, 1.442695
    %v451 = vpow.pop %v450
    %v452 = vmul.f32 %v429, 1.442695
    %v453 = vpow.pop %v452
    %v454 = vmul.f32 %v430, 1.442695
    %v455 = vpow.pop %v454
    %v456 = vmul.f32 %v431, 1.442695
    %v457 = vpow.pop %v456
    %v458 = vmul.f32 %v432, 1.442695
    %v459 = vpow.pop %v458
    %v460 = vmul.f32 %v433, 1.442695
    %v461 = vpow.pop %v460
    %v462 = vadd.f32 %v435, 1.0
    %v463 = vadd.f32 %v437, 1.0
    %v464 = vadd.f32 %v439, 1.0
    %v465 = vadd.f32 %v441, 1.0
    %v466 = vadd.f32 %v443, 1.0
    %v467 = vadd.f32 %v445, 1.0
    %v468 = vadd.f32 %v447, 1.0
    %v469 = vadd.f32 %v449, 1.0
    %v470 = vadd.f32 %v451, 1.0
    %v471 = vadd.f32 %v453, 1.0
    %v472 = vadd.f32 %v455, 1.0
    %v473 = vadd.f32 %v457, 1.0
    %v474 = vadd.f32 %v459, 1.0
    %v475 = vadd.f32 %v461, 1.0
    %v476 = vrcp.pop %v462
    %v477 = vmul.f32 1.0, %v476
    %v478 = vrcp.pop %v463
    %v479 = vmul.f32 1.0, %v478
    %v480 = vrcp.pop %v464
    %v481 = vmul.f32 1.0, %v480
    %v482 = vrcp.pop %v465
    %v483 = vmul.f32 1.0, %v482
    %v484 = vrcp.pop %v466
    %v485 = vmul.f32 1.0, %v484
    %v486 = vrcp.pop %v467
    %v487 = vmul.f32 1.0, %v486
    %v488 = vrcp.pop %v468
    %v489 = vmul.f32 1.0, %v488
    %v490 = vrcp.pop %v469
    %v491 = vmul.f32 1.0, %v490
    %v492 = vrcp.pop %v470
    %v493 = vmul.f32 1.0, %v492
    %v494 = vrcp.pop %v471
    %v495 = vmul.f32 1.0, %v494
    %v496 = vrcp.pop %v472
    %v497 = vmul.f32 1.0, %v496
    %v498 = vrcp.pop %v473
    %v499 = vmul.f32 1.0, %v498
    %v500 = vrcp.pop %v474
    %v501 = vmul.f32 1.0, %v500
    %v502 = vrcp.pop %v475
    %v503 = vmul.f32 1.0, %v502
    %v504 = vmul.f32 %v406, %v477
    %v505 = vmul.f32 %v407, %v479
    %v506 = vmul.f32 %v408, %v481
    %v507 = vmul.f32 %v409, %v483
    %v508 = vmul.f32 %v410, %v485
    %v509 = vmul.f32 %v411, %v487
    %v510 = vmul.f32 %v412, %v489
    %v511 = vmul.f32 %v413, %v491
    %v512 = vmul.f32 %v414, %v493
    %v513 = vmul.f32 %v415, %v495
    %v514 = vmul.f32 %v416, %v497
    %v515 = vmul.f32 %v417, %v499
    %v516 = vmul.f32 %v418, %v501
    %v517 = vmul.f32 %v419, %v503
    %518 = vmatprep.subr.mxu0 %v323
    %519 = vmatpush1.msra.mxu0 %v322
    %520 = vmatprep.subr.mxu0 %v321
    %521 = vmatpush1.msra.mxu0 %v320
    %522 = vmatprep.subr.mxu0 %v319
    %523 = vmatpush1.msra.mxu0 %v318
    %524 = vmatprep.subr.mxu0 %v317
    %525 = vmatpush1.msra.mxu0 %v316
    %526 = vmatprep.subr.mxu0 %v315
    %527 = vmatpush1.msra.mxu0 %v314
    %528 = vmatprep.subr.mxu0 %v313
    %529 = vmatpush1.msra.mxu0 %v312
    %530 = vmatprep.subr.mxu0 %v311
    %531 = vmatpush1.msra.mxu0 %v310
    %532 = vmatprep.subr.mxu0 %v309
    %533 = vmatpush1.msra.mxu0 %v308
    %534 = vmatprep.subr.mxu0 %v307
    %535 = vmatpush1.msra.mxu0 %v306
    %536 = vmatprep.subr.mxu0 %v305
    %537 = vmatpush1.msra.mxu0 %v304
    %538 = vmatprep.subr.mxu0 %v303
    %539 = vmatpush1.msra.mxu0 %v302
    %540 = vmatprep.subr.mxu0 %v301
    %541 = vmatpush1.msra.mxu0 %v300
    %542 = vmatprep.subr.mxu0 %v299
    %543 = vmatpush1.msra.mxu0 %v298
    %544 = vmatprep.subr.mxu0 %v297
    %545 = vmatpush1.msra.mxu0 %v296
    %546 = vmatprep.subr.mxu0 %v295
    %547 = vmatpush1.msra.mxu0 %v294
    %548 = vmatprep.subr.mxu0 %v293
    %549 = vmatpush1.msra.mxu0 %v292
    %550 = vmatprep.subr.mxu0 %v355
    %551 = vmatpush2.msra.mxu0 %v354
    %552 = vmatprep.subr.mxu0 %v353
    %553 = vmatpush2.msra.mxu0 %v352
    %554 = vmatprep.subr.mxu0 %v351
    %555 = vmatpush2.msra.mxu0 %v350
    %556 = vmatprep.subr.mxu0 %v349
    %557 = vmatpush2.msra.mxu0 %v348
    %558 = vmatprep.subr.mxu0 %v347
    %559 = vmatpush2.msra.mxu0 %v346
    %560 = vmatprep.subr.mxu0 %v345
    %561 = vmatpush2.msra.mxu0 %v344
    %562 = vmatprep.subr.mxu0 %v343
    %563 = vmatpush2.msra.mxu0 %v342
    %564 = vmatprep.subr.mxu0 %v341
    %565 = vmatpush2.msra.mxu0 %v340
    %566 = vmatprep.subr.mxu0 %v339
    %567 = vmatpush2.msra.mxu0 %v338
    %568 = vmatprep.subr.mxu0 %v337
    %569 = vmatpush2.msra.mxu0 %v336
    %570 = vmatprep.subr.mxu0 %v335
    %571 = vmatpush2.msra.mxu0 %v334
    %572 = vmatprep.subr.mxu0 %v333
    %573 = vmatpush2.msra.mxu0 %v332
    %574 = vmatprep.subr.mxu0 %v331
    %575 = vmatpush2.msra.mxu0 %v330
    %576 = vmatprep.subr.mxu0 %v329
    %577 = vmatpush2.msra.mxu0 %v328
    %578 = vmatprep.subr.mxu0 %v327
    %579 = vmatpush2.msra.mxu0 %v326
    %580 = vmatprep.subr.mxu0 %v325
    %581 = vmatpush2.msra.mxu0 %v324
    %582 = vmatprep.mubr.f32.mxu0 %v505
    %583 = vmatmul.mubr.f32.gmra.mxu0 %v504
    %v584 = vpop.f32.mrf.mxu0
    %v585 = vadd.f32 0.0, %v584
    %v586 = vpop.f32.mrf.mxu0
    %v587 = vadd.f32 0.0, %v586
    %588 = vmatprep.mubr.f32.mxu0 %v507
    %589 = vmatmul.mubr.f32.gmra.mxu0 %v506
    %v590 = vpop.f32.mrf.mxu0
    %v591 = vadd.f32 0.0, %v590
    %v592 = vpop.f32.mrf.mxu0
    %v593 = vadd.f32 0.0, %v592
    %594 = vmatprep.mubr.f32.mxu0 %v509
    %595 = vmatmul.mubr.f32.gmra.mxu0 %v508
    %v596 = vpop.f32.mrf.mxu0
    %v597 = vadd.f32 0.0, %v596
    %v598 = vpop.f32.mrf.mxu0
    %v599 = vadd.f32 0.0, %v598
    %600 = vmatprep.mubr.f32.mxu0 %v511
    %601 = vmatmul.mubr.f32.gmra.mxu0 %v510
    %v602 = vpop.f32.mrf.mxu0
    %v603 = vadd.f32 0.0, %v602
    %v604 = vpop.f32.mrf.mxu0
    %v605 = vadd.f32 0.0, %v604
    %606 = vmatprep.mubr.f32.mxu0 %v513
    %607 = vmatmul.mubr.f32.gmra.mxu0 %v512
    %v608 = vpop.f32.mrf.mxu0
    %v609 = vadd.f32 0.0, %v608
    %v610 = vpop.f32.mrf.mxu0
    %v611 = vadd.f32 0.0, %v610
    %612 = vmatprep.mubr.f32.mxu0 %v515
    %613 = vmatmul.mubr.f32.gmra.mxu0 %v514
    %v614 = vpop.f32.mrf.mxu0
    %v615 = vadd.f32 0.0, %v614
    %v616 = vpop.f32.mrf.mxu0
    %v617 = vadd.f32 0.0, %v616
    %618 = vmatprep.mubr.f32.mxu0 %v517
    %619 = vmatmul.mubr.f32.gmra.mxu0 %v516
    %v620 = vpop.f32.mrf.mxu0
    %v621 = vadd.f32 0.0, %v620
    %v622 = vpop.f32.mrf.mxu0
    %v623 = vadd.f32 0.0, %v622
    %624 = vdwg.mxu0
    %v625 = vlaneseq
    %v626 = vshrl.u32 %v625, 7
    %v627 = vsub.s32 2, %v626
    %v628 = vrot.slane %v78, %v627
    %v629 = vadd.f32 %v585, %v628
    %v630 = vadd.f32 %v591, %v628
    %v631 = vadd.f32 %v597, %v628
    %v632 = vadd.f32 %v603, %v628
    %v633 = vadd.f32 %v609, %v628
    %v634 = vadd.f32 %v615, %v628
    %v635 = vadd.f32 %v621, %v628
    %v636 = vlaneseq
    %v637 = vshrl.u32 %v636, 7
    %v638 = vsub.s32 3, %v637
    %v639 = vrot.slane %v78, %v638
    %v640 = vadd.f32 %v587, %v639
    %v641 = vadd.f32 %v593, %v639
    %v642 = vadd.f32 %v599, %v639
    %v643 = vadd.f32 %v605, %v639
    %v644 = vadd.f32 %v611, %v639
    %v645 = vadd.f32 %v617, %v639
    %v646 = vadd.f32 %v623, %v639
    %v647 = vadd.f32 %v640, 1.0
    %v648 = vadd.f32 %v641, 1.0
    %v649 = vadd.f32 %v642, 1.0
    %v650 = vadd.f32 %v643, 1.0
    %v651 = vadd.f32 %v644, 1.0
    %v652 = vadd.f32 %v645, 1.0
    %v653 = vadd.f32 %v646, 1.0
    %v654 = vmul.f32 %v399, %v647
    %v655 = vmul.f32 %v400, %v648
    %v656 = vmul.f32 %v401, %v649
    %v657 = vmul.f32 %v402, %v650
    %v658 = vmul.f32 %v403, %v651
    %v659 = vmul.f32 %v404, %v652
    %v660 = vmul.f32 %v405, %v653
    %v661 = vadd.f32 %v654, %v629
    %v662 = vadd.f32 %v655, %v630
    %v663 = vadd.f32 %v656, %v631
    %v664 = vadd.f32 %v657, %v632
    %v665 = vadd.f32 %v658, %v633
    %v666 = vadd.f32 %v659, %v634
    %v667 = vadd.f32 %v660, %v635
    %668 = vst [vmem:[#allocation10] sm:$0xff] %v661
    %669 = vst [vmem:[#allocation10 + $0x8] sm:$0xff] %v662
    %670 = vst [vmem:[#allocation10 + $0x10] sm:$0xff] %v663
    %671 = vst [vmem:[#allocation10 + $0x18] sm:$0xff] %v664
    %672 = vst [vmem:[#allocation10 + $0x20] sm:$0xff] %v665
    %673 = vst [vmem:[#allocation10 + $0x28] sm:$0xff] %v666
    %674 = vst [vmem:[#allocation10 + $0x30] sm:$0xff] %v667
    // Predicated region
    $region34: #{tpu_custom_call.1} parent=1 // pred_check
      _
    $region35: #{tpu_custom_call.1} parent=1 // pred_check_branch
      %676 = sbr.rel (0) target = $region37
    $region36: #{tpu_custom_call.1} parent=1 // pred_region
      %s678 = ssub.s32 896, 896
      %679 = vsyncadd [#allocation4], %s678
      %s680 = sshll.u32 [#allocation10], 4
      %s681 = int_to_ptr.vmem [resolvable:$true] %s680
      %686 = dma.vmem_to_hbm [thread:$0]  %s681, 896, %s4, [#allocation4], 128, 128, 8
    $region37: #{tpu_custom_call.1} parent=1 // pred_fallthru
      _
    // Predicated region
    $region38: #{tpu_custom_call.1} parent=1 // pred_check
      _
    $region39: #{tpu_custom_call.1} parent=1 // pred_check_branch
      %688 = sbr.rel (0) target = $region41
    $region40: #{tpu_custom_call.1} parent=1 // pred_region
      %689 = dma.done [#allocation4], 896
    $region41: #{tpu_custom_call.1} parent=1 // pred_fallthru
      _
    %690 = vsyncpa [#allocation3], 1
    %691 = vsyncpa [#allocation6], 1
    %692 = vsyncpa [#allocation9], 1
    %693 = vsyncpa [#allocation4], 1

</llo_original>
